<compile_context>
chip_gen: v7x
topology: tpu7x:2x2x1
jax: 0.10.0
libtpu: 0.0.40
codegen_flags: <defaults>
</compile_context>

<pallas_src>
import jax
import jax.numpy as jnp
from jax.experimental import pallas as pl
from jax.experimental.pallas import tpu as pltpu


def _mlp_kernel_scalar_t(x_ref, w1x_ref, b1_ref, w2_ref, b2_ref,
                         w3_ref, b3_ref, o_ref):
    # fc1 with the scalar time already folded into the bias:
    #   b1_ref == b1 + t * W1[D:, :]
    h = jnp.dot(x_ref[...], w1x_ref[...], preferred_element_type=jnp.float32)
    h = jnp.maximum(h + b1_ref[...], 0.0)
    # fc2 + relu (hidden activation stays in vregs/VMEM, never touches HBM)
    h = jnp.dot(h.astype(w2_ref.dtype), w2_ref[...],
                preferred_element_type=jnp.float32)
    h = jnp.maximum(h + b2_ref[...], 0.0)
    # fc3 -> narrow exact-width output tile (no lane padding)
    o = jnp.dot(h.astype(w3_ref.dtype), w3_ref[...],
                preferred_element_type=jnp.float32)
    o_ref[...] = (o + b3_ref[...]).astype(o_ref.dtype)


def _mlp_kernel_vec_t(x_ref, t_ref, w1x_ref, w1t_ref, b1_ref,
                      w2_ref, b2_ref, w3_ref, b3_ref, o_ref):
    # fc1: [x, t] @ W1 + b1  ==  x @ W1[:D] + t * W1[D:] + b1   (concat folded)
    h = jnp.dot(x_ref[...], w1x_ref[...], preferred_element_type=jnp.float32)
    h = h + t_ref[...].astype(jnp.float32) * w1t_ref[...].astype(jnp.float32)
    h = jnp.maximum(h + b1_ref[...], 0.0)
    h = jnp.dot(h.astype(w2_ref.dtype), w2_ref[...],
                preferred_element_type=jnp.float32)
    h = jnp.maximum(h + b2_ref[...], 0.0)
    o = jnp.dot(h.astype(w3_ref.dtype), w3_ref[...],
                preferred_element_type=jnp.float32)
    o_ref[...] = (o + b3_ref[...]).astype(o_ref.dtype)


def velocity_field_forward(params, x, t, *, tile_b=2048, use_bf16=False):
    """Pallas equivalent of VelocityFieldNN.forward(x, t).

    x : (B, data_dim) float32
    t : scalar, (1,), (B,) or (B, 1) float32
    """
    w1, b1, w2, b2, w3, b3 = params
    B, data_dim = x.shape
    input_dim, hidden_dim = w1.shape
    output_dim = w3.shape[1]
    assert input_dim == data_dim + 1, "fc1 expects [x, t] concatenated features"

    compute_dtype = jnp.bfloat16 if use_bf16 else jnp.float32

    # Split W1 so the torch.cat([x, t]) never materializes in HBM.
    w1x = w1[:data_dim, :].astype(compute_dtype)   # (D, H)
    w1t = jnp.asarray(w1[data_dim:, :], jnp.float32)  # (1, H)
    b1 = jnp.asarray(b1, jnp.float32).reshape(1, hidden_dim)
    b2 = jnp.asarray(b2, jnp.float32).reshape(1, hidden_dim)
    b3 = jnp.asarray(b3, jnp.float32).reshape(1, output_dim)
    w2c = w2.astype(compute_dtype)
    w3c = w3.astype(compute_dtype)
    x = x.astype(compute_dtype)

    t_arr = jnp.asarray(t, jnp.float32)
    scalar_t = (t_arr.size == 1)          # static (shape-based) decision

    # Batch tiling: large tiles amortize the ~0.35 us/step grid overhead, but
    # keep >= 2 grid steps when possible so "parallel" can shard the batch
    # across v7x's two TensorCores.  tile_b stays a multiple of 8.
    tile_b = max(8, (int(tile_b) // 8) * 8)
    if B > 8:
        half = ((B + 1) // 2 + 7) // 8 * 8      # round_up(ceil(B/2), 8)
        tile_b = min(tile_b, half)
    else:
        tile_b = 8
    grid = (pl.cdiv(B, tile_b),)
    # No wrapper-side batch padding: Pallas masks the ragged last block.

    def row_spec(cols):
        return pl.BlockSpec((tile_b, cols), lambda i: (i, 0))

    def resident(a):  # whole array as one block, same block every grid step
        nd = a.ndim
        return pl.BlockSpec(a.shape, lambda i: (0,) * nd)

    out_shape = jax.ShapeDtypeStruct((B, output_dim), jnp.float32)
    out_spec = pl.BlockSpec((tile_b, output_dim), lambda i: (i, 0))
    cparams = pltpu.CompilerParams(
        dimension_semantics=("parallel",),   # shard batch across TCs (v7x)
    )

    if scalar_t:
        # Fold the scalar time into the fc1 bias: exact, removes the (B,1)
        # input array, its per-tile DMA and the per-tile broadcast mul/add.
        b1_eff = b1 + t_arr.reshape(()) * w1t
        out = pl.pallas_call(
            _mlp_kernel_scalar_t,
            out_shape=out_shape,
            grid=grid,
            in_specs=[
                row_spec(data_dim),                 # x tile
                resident(w1x), resident(b1_eff),
                resident(w2c), resident(b2),
                resident(w3c), resident(b3),
            ],
            out_specs=out_spec,
            compiler_params=cparams,
        )(x, w1x, b1_eff, w2c, b2, w3c, b3)
    else:
        # Genuinely per-row t: keep the (B,1) time column as a tiled input.
        t_col = jnp.broadcast_to(t_arr.reshape(-1, 1), (B, 1)).astype(compute_dtype)
        w1t_c = w1t.astype(compute_dtype)
        out = pl.pallas_call(
            _mlp_kernel_vec_t,
            out_shape=out_shape,
            grid=grid,
            in_specs=[
                row_spec(data_dim),                 # x tile
                row_spec(1),                        # t tile
                resident(w1x), resident(w1t_c), resident(b1),
                resident(w2c), resident(b2),
                resident(w3c), resident(b3),
            ],
            out_specs=out_spec,
            compiler_params=cparams,
        )(x, t_col, w1x, w1t_c, b1, w2c, b2, w3c, b3)

    return out


def init_params(key, input_dim, hidden_dim, output_dim):
    """Deterministic synthetic parameters (PyTorch-style uniform fan-in init)."""
    ks = jax.random.split(key, 6)

    def linear(kw, kb, fan_in, fan_out):
        bound = 1.0 / jnp.sqrt(fan_in)
        # stored as (in, out) == torch weight.T
        w = jax.random.uniform(kw, (fan_in, fan_out), jnp.float32, -bound, bound)
        b = jax.random.uniform(kb, (1, fan_out), jnp.float32, -bound, bound)
        return w, b

    w1, b1 = linear(ks[0], ks[1], input_dim, hidden_dim)
    w2, b2 = linear(ks[2], ks[3], hidden_dim, hidden_dim)
    w3, b3 = linear(ks[4], ks[5], hidden_dim, output_dim)
    return (w1, b1, w2, b2, w3, b3)


def _reference_forward(params, x, t):
    """Pure-JAX reference mirroring the PyTorch module."""
    w1, b1, w2, b2, w3, b3 = params
    B = x.shape[0]
    t_exp = jnp.broadcast_to(jnp.asarray(t, x.dtype), (B, 1))
    h = jnp.concatenate([x, t_exp], axis=-1)
    h = jax.nn.relu(h @ w1 + b1)
    h = jax.nn.relu(h @ w2 + b2)
    return h @ w3 + b3


if __name__ == "__main__":
    # Small shapes consistent with the module: data_dim=3 (+1 time feature),
    # hidden=32, output=3.  batch=16 -> tile_b is auto-clamped to 8, so the
    # batch grid has 2 steps (exercises multi-step pipelining / megacore path).
    batch, data_dim, hidden_dim, output_dim = 16, 3, 32, 3
    input_dim = data_dim + 1  # fc1 sees [x, t]

    key = jax.random.PRNGKey(0)
    k_params, k_x, k_t = jax.random.split(key, 3)

    params = init_params(k_params, input_dim, hidden_dim, output_dim)
    x = jax.random.normal(k_x, (batch, data_dim), jnp.float32)
    t_vec = jax.random.uniform(k_t, (batch, 1), jnp.float32)   # per-row t
    t_scalar = jnp.float32(0.37)                               # scalar ODE-solver t

    # Per-row t path (general kernel).
    out_vec = jax.block_until_ready(velocity_field_forward(params, x, t_vec))
    ref_vec = _reference_forward(params, x, t_vec)
    assert out_vec.shape == (batch, output_dim)
    assert jnp.allclose(out_vec, ref_vec, atol=1e-5, rtol=1e-5), float(
        jnp.max(jnp.abs(out_vec - ref_vec)))

    # Scalar t path (t folded into the fc1 bias inside the wrapper).
    out_sc = jax.block_until_ready(velocity_field_forward(params, x, t_scalar))
    ref_sc = _reference_forward(params, x, t_scalar)
    assert out_sc.shape == (batch, output_dim)
    assert jnp.allclose(out_sc, ref_sc, atol=1e-5, rtol=1e-5), float(
        jnp.max(jnp.abs(out_sc - ref_sc)))

    print("KERNEL_OK")
</pallas_src>

<mosaic_0001>
module attributes {stable_mosaic.version = 11 : i64} {
  func.func @_mlp_kernel_vec_t(%arg0: i32, %arg1: memref<8x3xf32, #tpu.memory_space<vmem>>, %arg2: memref<8x1xf32, #tpu.memory_space<vmem>>, %arg3: memref<3x32xf32, #tpu.memory_space<vmem>>, %arg4: memref<1x32xf32, #tpu.memory_space<vmem>>, %arg5: memref<1x32xf32, #tpu.memory_space<vmem>>, %arg6: memref<32x32xf32, #tpu.memory_space<vmem>>, %arg7: memref<1x32xf32, #tpu.memory_space<vmem>>, %arg8: memref<32x3xf32, #tpu.memory_space<vmem>>, %arg9: memref<1x3xf32, #tpu.memory_space<vmem>>, %arg10: memref<8x3xf32, #tpu.memory_space<vmem>>) attributes {dimension_semantics = [#tpu.dimension_semantics<parallel>], iteration_bounds = array<i64: 2>, scalar_prefetch = 0 : i64, scratch_operands = 0 : i64, tpu.core_type = #tpu.core_type<tc>, window_params = [{transform_indices = @transform_0, window_bounds = array<i64: 8, 3>}, {transform_indices = @transform_1, window_bounds = array<i64: 8, 1>}, {pipeline_mode = #tpu.pipeline_mode<synchronous>, transform_indices = @transform_2, window_bounds = array<i64: 3, 32>}, {pipeline_mode = #tpu.pipeline_mode<synchronous>, transform_indices = @transform_3, window_bounds = array<i64: 1, 32>}, {pipeline_mode = #tpu.pipeline_mode<synchronous>, transform_indices = @transform_4, window_bounds = array<i64: 1, 32>}, {pipeline_mode = #tpu.pipeline_mode<synchronous>, transform_indices = @transform_5, window_bounds = array<i64: 32, 32>}, {pipeline_mode = #tpu.pipeline_mode<synchronous>, transform_indices = @transform_6, window_bounds = array<i64: 1, 32>}, {pipeline_mode = #tpu.pipeline_mode<synchronous>, transform_indices = @transform_7, window_bounds = array<i64: 32, 3>}, {pipeline_mode = #tpu.pipeline_mode<synchronous>, transform_indices = @transform_8, window_bounds = array<i64: 1, 3>}, {transform_indices = @transform_9, window_bounds = array<i64: 8, 3>}]} {
    %c0 = arith.constant 0 : index
    %c0_0 = arith.constant 0 : index
    %0 = vector.load %arg1[%c0, %c0_0] : memref<8x3xf32, #tpu.memory_space<vmem>>, vector<8x3xf32>
    %c0_1 = arith.constant 0 : index
    %c0_2 = arith.constant 0 : index
    %1 = vector.load %arg3[%c0_1, %c0_2] : memref<3x32xf32, #tpu.memory_space<vmem>>, vector<3x32xf32>
    %cst = arith.constant dense<0.000000e+00> : vector<8x32xf32>
    %2 = tpu.matmul %0, %1, %cst {dimension_numbers = #tpu.dot_dimension_numbers<[1], [0], [0], [1], [0, 0, 1, 1], [], []>} : vector<8x3xf32>, vector<3x32xf32>, vector<8x32xf32> -> vector<8x32xf32>
    %c0_3 = arith.constant 0 : index
    %c0_4 = arith.constant 0 : index
    %3 = vector.load %arg2[%c0_3, %c0_4] : memref<8x1xf32, #tpu.memory_space<vmem>>, vector<8x1xf32>
    %c0_5 = arith.constant 0 : index
    %c0_6 = arith.constant 0 : index
    %4 = vector.load %arg4[%c0_5, %c0_6] : memref<1x32xf32, #tpu.memory_space<vmem>>, vector<1x32xf32>
    %5 = vector.broadcast %3 : vector<8x1xf32> to vector<8x32xf32>
    %6 = vector.broadcast %4 : vector<1x32xf32> to vector<8x32xf32>
    %7 = arith.mulf %5, %6 : vector<8x32xf32>
    %8 = arith.addf %2, %7 : vector<8x32xf32>
    %c0_7 = arith.constant 0 : index
    %c0_8 = arith.constant 0 : index
    %9 = vector.load %arg5[%c0_7, %c0_8] : memref<1x32xf32, #tpu.memory_space<vmem>>, vector<1x32xf32>
    %10 = vector.broadcast %9 : vector<1x32xf32> to vector<8x32xf32>
    %11 = arith.addf %8, %10 : vector<8x32xf32>
    %cst_9 = arith.constant 0.000000e+00 : f32
    %12 = vector.broadcast %cst_9 : f32 to vector<8x32xf32>
    %13 = arith.maximumf %11, %12 : vector<8x32xf32>
    %c0_10 = arith.constant 0 : index
    %c0_11 = arith.constant 0 : index
    %14 = vector.load %arg6[%c0_10, %c0_11] : memref<32x32xf32, #tpu.memory_space<vmem>>, vector<32x32xf32>
    %cst_12 = arith.constant dense<0.000000e+00> : vector<8x32xf32>
    %15 = tpu.matmul %13, %14, %cst_12 {dimension_numbers = #tpu.dot_dimension_numbers<[1], [0], [0], [1], [0, 0, 1, 1], [], []>} : vector<8x32xf32>, vector<32x32xf32>, vector<8x32xf32> -> vector<8x32xf32>
    %c0_13 = arith.constant 0 : index
    %c0_14 = arith.constant 0 : index
    %16 = vector.load %arg7[%c0_13, %c0_14] : memref<1x32xf32, #tpu.memory_space<vmem>>, vector<1x32xf32>
    %17 = vector.broadcast %16 : vector<1x32xf32> to vector<8x32xf32>
    %18 = arith.addf %15, %17 : vector<8x32xf32>
    %cst_15 = arith.constant 0.000000e+00 : f32
    %19 = vector.broadcast %cst_15 : f32 to vector<8x32xf32>
    %20 = arith.maximumf %18, %19 : vector<8x32xf32>
    %c0_16 = arith.constant 0 : index
    %c0_17 = arith.constant 0 : index
    %21 = vector.load %arg8[%c0_16, %c0_17] : memref<32x3xf32, #tpu.memory_space<vmem>>, vector<32x3xf32>
    %cst_18 = arith.constant dense<0.000000e+00> : vector<8x3xf32>
    %22 = tpu.matmul %20, %21, %cst_18 {dimension_numbers = #tpu.dot_dimension_numbers<[1], [0], [0], [1], [0, 0, 1, 1], [], []>} : vector<8x32xf32>, vector<32x3xf32>, vector<8x3xf32> -> vector<8x3xf32>
    %c0_19 = arith.constant 0 : index
    %c0_20 = arith.constant 0 : index
    %23 = vector.load %arg9[%c0_19, %c0_20] : memref<1x3xf32, #tpu.memory_space<vmem>>, vector<1x3xf32>
    %24 = vector.broadcast %23 : vector<1x3xf32> to vector<8x3xf32>
    %25 = arith.addf %22, %24 : vector<8x3xf32>
    %c0_21 = arith.constant 0 : index
    %c0_22 = arith.constant 0 : index
    %26 = vector.load %arg10[%c0_21, %c0_22] : memref<8x3xf32, #tpu.memory_space<vmem>>, vector<8x3xf32>
    tpu.vector_store %arg10[%c0_21, %c0_22], %25 {strides = array<i32>} : memref<8x3xf32, #tpu.memory_space<vmem>>, vector<8x3xf32>,
    return
  }
  func.func @transform_0(%arg0: i32) -> (i32, i32) {
    %c0_i32 = arith.constant 0 : i32
    %c0_i32_0 = arith.constant 0 : i32
    return %arg0, %c0_i32 : i32, i32
  }
  func.func @transform_1(%arg0: i32) -> (i32, i32) {
    %c0_i32 = arith.constant 0 : i32
    %c0_i32_0 = arith.constant 0 : i32
    return %arg0, %c0_i32 : i32, i32
  }
  func.func @transform_2(%arg0: i32) -> (i32, i32) {
    %c0_i32 = arith.constant 0 : i32
    %c0_i32_0 = arith.constant 0 : i32
    %c0_i32_1 = arith.constant 0 : i32
    return %c0_i32, %c0_i32_0 : i32, i32
  }
  func.func @transform_3(%arg0: i32) -> (i32, i32) {
    %c0_i32 = arith.constant 0 : i32
    %c0_i32_0 = arith.constant 0 : i32
    %c0_i32_1 = arith.constant 0 : i32
    return %c0_i32, %c0_i32_0 : i32, i32
  }
  func.func @transform_4(%arg0: i32) -> (i32, i32) {
    %c0_i32 = arith.constant 0 : i32
    %c0_i32_0 = arith.constant 0 : i32
    %c0_i32_1 = arith.constant 0 : i32
    return %c0_i32, %c0_i32_0 : i32, i32
  }
  func.func @transform_5(%arg0: i32) -> (i32, i32) {
    %c0_i32 = arith.constant 0 : i32
    %c0_i32_0 = arith.constant 0 : i32
    %c0_i32_1 = arith.constant 0 : i32
    return %c0_i32, %c0_i32_0 : i32, i32
  }
  func.func @transform_6(%arg0: i32) -> (i32, i32) {
    %c0_i32 = arith.constant 0 : i32
    %c0_i32_0 = arith.constant 0 : i32
    %c0_i32_1 = arith.constant 0 : i32
    return %c0_i32, %c0_i32_0 : i32, i32
  }
  func.func @transform_7(%arg0: i32) -> (i32, i32) {
    %c0_i32 = arith.constant 0 : i32
    %c0_i32_0 = arith.constant 0 : i32
    %c0_i32_1 = arith.constant 0 : i32
    return %c0_i32, %c0_i32_0 : i32, i32
  }
  func.func @transform_8(%arg0: i32) -> (i32, i32) {
    %c0_i32 = arith.constant 0 : i32
    %c0_i32_0 = arith.constant 0 : i32
    %c0_i32_1 = arith.constant 0 : i32
    return %c0_i32, %c0_i32_0 : i32, i32
  }
  func.func @transform_9(%arg0: i32) -> (i32, i32) {
    %c0_i32 = arith.constant 0 : i32
    %c0_i32_0 = arith.constant 0 : i32
    return %arg0, %c0_i32 : i32, i32
  }
}

</mosaic_0001>

<llo_original>
// kernel: tpu_custom_call.1
$region0: #{tpu_custom_call.1}
  #allocation0 [shape = 'u32[]', space=smem, size = 0x4, offset = 0x4, fixed_abs, tag = 'smem constant byte address 0x4 - core index']
  #allocation1 [shape = 'u32[144,128]{1,0:T(1,128)}', space=vmem, size = 0x12000, scoped, tag = 'internal scratch']
  %s0 = inlined_call_operand.vmem [shape: f32[16,3], index: 0, kind: input, shape index: {}]
  %s1 = inlined_call_operand.vmem [shape: f32[16,1], index: 1, kind: input, shape index: {}]
  %s2 = inlined_call_operand.vmem [shape: f32[3,32], index: 2, kind: input, shape index: {}]
  %s3 = inlined_call_operand.vmem [shape: f32[1,32], index: 3, kind: input, shape index: {}]
  %s4 = inlined_call_operand.vmem [shape: f32[1,32], index: 4, kind: input, shape index: {}]
  %s5 = inlined_call_operand.vmem [shape: f32[32,32], index: 5, kind: input, shape index: {}]
  %s6 = inlined_call_operand.vmem [shape: f32[1,32], index: 6, kind: input, shape index: {}]
  %s7 = inlined_call_operand.vmem [shape: f32[32,3], index: 7, kind: input, shape index: {}]
  %s8 = inlined_call_operand.vmem [shape: f32[1,3], index: 8, kind: input, shape index: {}]
  %s9 = inlined_call_operand.vmem [shape: f32[16,3], index: 9, kind: output, shape index: {}]
  %s10 = sld [smem:[#allocation0]]
  $region69: #{tpu_custom_call.1} parent=0
    _
  %s12 = ssub.s32 1, %s10
  %s13 = scalar_select 0, %s12, %s10
  loop: start=0, step=1, limit=4
  $region2: #{tpu_custom_call.1} parent=0 // loop_pre_header
    _
  $region3: #{tpu_custom_call.1} parent=0 // loop_header
    %s15 = sphi 0, %s19
    %p16 = scmp.ge.s32.totalorder %s15, 4
    %s25 = sphi 0, %s27
    %s28 = sphi 0, %s25
    %s29 = sphi 0, %s28
    %s45 = sphi 0, %s29
    %s51 = sphi 0, %s53
    %s54 = sphi 0, %s51
    %s55 = sphi 0, %s54
    %s71 = sphi 0, %s55
    %s75 = sphi 0, %s75
    %s77 = sphi 0, %s75
    %s78 = sphi 0, %s77
    %s92 = sphi 0, %s78
    %s96 = sphi 0, %s96
    %s98 = sphi 0, %s96
    %s99 = sphi 0, %s98
    %s113 = sphi 0, %s99
    %s117 = sphi 0, %s117
    %s119 = sphi 0, %s117
    %s120 = sphi 0, %s119
    %s134 = sphi 0, %s120
    %s138 = sphi 0, %s138
    %s140 = sphi 0, %s138
    %s141 = sphi 0, %s140
    %s155 = sphi 0, %s141
    %s159 = sphi 0, %s159
    %s161 = sphi 0, %s159
    %s162 = sphi 0, %s161
    %s176 = sphi 0, %s162
    %s180 = sphi 0, %s180
    %s182 = sphi 0, %s180
    %s183 = sphi 0, %s182
    %s197 = sphi 0, %s183
    %s201 = sphi 0, %s201
    %s203 = sphi 0, %s201
    %s204 = sphi 0, %s203
    %s218 = sphi 0, %s204
    %s224 = sphi 0, %s226
    %s227 = sphi 0, %s224
    %s228 = sphi 0, %s227
    %s244 = sphi 0, %s228
  $region4: #{tpu_custom_call.1} parent=0 // loop_header_branch
    %18 = sbr.rel (%p16) target = $region8
  $region5: #{tpu_custom_call.1} parent=0 // loop_body
    %s20 = ssub.s32 %s15, 1
    %s21 = ssub.s32 %s15, 2
    %s22 = sadd.s32 %s15, 1
    %s23 = ssub.s32 %s15, %s22
    %p24 = scmp.eq.s32.totalorder %s23, 0
    %s26 = sadd.s32 %s25, 1
    %s27 = scalar_select %p24, %s25, %s26
    %p30 = pneg %p24
    %p31 = scmp.eq.s32.totalorder %s15, 1
    %p32 = por %p30, %p31
    %p33 = scmp.ne.s32.totalorder %s25, %s28
    %p34 = scmp.eq.s32.totalorder %s15, 0
    %p35 = por %p33, %p34
    %p36 = scmp.ne.s32.totalorder %s25, %s28
    %p37 = scmp.eq.s32.totalorder %s20, 1
    %p38 = por %p36, %p37
    %p39 = scmp.ne.s32.totalorder %s28, %s29
    %p40 = scmp.eq.s32.totalorder %s20, 0
    %p41 = por %p39, %p40
    %p42 = scmp.ne.s32.totalorder %s28, %s29
    %p43 = scmp.eq.s32.totalorder %s21, 1
    %p44 = por %p42, %p43
    %p46 = scmp.ne.s32.totalorder %s29, %s45
    %p47 = scmp.eq.s32.totalorder %s21, 0
    %p48 = por %p46, %p47
    %s49 = ssub.s32 %s15, %s22
    %p50 = scmp.eq.s32.totalorder %s49, 0
    %s52 = sadd.s32 %s51, 1
    %s53 = scalar_select %p50, %s51, %s52
    %p56 = pneg %p50
    %p57 = scmp.eq.s32.totalorder %s15, 1
    %p58 = por %p56, %p57
    %p59 = scmp.ne.s32.totalorder %s51, %s54
    %p60 = scmp.eq.s32.totalorder %s15, 0
    %p61 = por %p59, %p60
    %p62 = scmp.ne.s32.totalorder %s51, %s54
    %p63 = scmp.eq.s32.totalorder %s20, 1
    %p64 = por %p62, %p63
    %p65 = scmp.ne.s32.totalorder %s54, %s55
    %p66 = scmp.eq.s32.totalorder %s20, 0
    %p67 = por %p65, %p66
    %p68 = scmp.ne.s32.totalorder %s54, %s55
    %p69 = scmp.eq.s32.totalorder %s21, 1
    %p70 = por %p68, %p69
    %p72 = scmp.ne.s32.totalorder %s55, %s71
    %p73 = scmp.eq.s32.totalorder %s21, 0
    %p74 = por %p72, %p73
    %s76 = sadd.s32 %s75, 1
    %p79 = scmp.eq.s32.totalorder %s15, 1
    %p80 = scmp.ne.s32.totalorder %s75, %s77
    %p81 = scmp.eq.s32.totalorder %s15, 0
    %p82 = por %p80, %p81
    %p83 = scmp.ne.s32.totalorder %s75, %s77
    %p84 = scmp.eq.s32.totalorder %s20, 1
    %p85 = por %p83, %p84
    %p86 = scmp.ne.s32.totalorder %s77, %s78
    %p87 = scmp.eq.s32.totalorder %s20, 0
    %p88 = por %p86, %p87
    %p89 = scmp.ne.s32.totalorder %s77, %s78
    %p90 = scmp.eq.s32.totalorder %s21, 1
    %p91 = por %p89, %p90
    %p93 = scmp.ne.s32.totalorder %s78, %s92
    %p94 = scmp.eq.s32.totalorder %s21, 0
    %p95 = por %p93, %p94
    %s97 = sadd.s32 %s96, 1
    %p100 = scmp.eq.s32.totalorder %s15, 1
    %p101 = scmp.ne.s32.totalorder %s96, %s98
    %p102 = scmp.eq.s32.totalorder %s15, 0
    %p103 = por %p101, %p102
    %p104 = scmp.ne.s32.totalorder %s96, %s98
    %p105 = scmp.eq.s32.totalorder %s20, 1
    %p106 = por %p104, %p105
    %p107 = scmp.ne.s32.totalorder %s98, %s99
    %p108 = scmp.eq.s32.totalorder %s20, 0
    %p109 = por %p107, %p108
    %p110 = scmp.ne.s32.totalorder %s98, %s99
    %p111 = scmp.eq.s32.totalorder %s21, 1
    %p112 = por %p110, %p111
    %p114 = scmp.ne.s32.totalorder %s99, %s113
    %p115 = scmp.eq.s32.totalorder %s21, 0
    %p116 = por %p114, %p115
    %s118 = sadd.s32 %s117, 1
    %p121 = scmp.eq.s32.totalorder %s15, 1
    %p122 = scmp.ne.s32.totalorder %s117, %s119
    %p123 = scmp.eq.s32.totalorder %s15, 0
    %p124 = por %p122, %p123
    %p125 = scmp.ne.s32.totalorder %s117, %s119
    %p126 = scmp.eq.s32.totalorder %s20, 1
    %p127 = por %p125, %p126
    %p128 = scmp.ne.s32.totalorder %s119, %s120
    %p129 = scmp.eq.s32.totalorder %s20, 0
    %p130 = por %p128, %p129
    %p131 = scmp.ne.s32.totalorder %s119, %s120
    %p132 = scmp.eq.s32.totalorder %s21, 1
    %p133 = por %p131, %p132
    %p135 = scmp.ne.s32.totalorder %s120, %s134
    %p136 = scmp.eq.s32.totalorder %s21, 0
    %p137 = por %p135, %p136
    %s139 = sadd.s32 %s138, 1
    %p142 = scmp.eq.s32.totalorder %s15, 1
    %p143 = scmp.ne.s32.totalorder %s138, %s140
    %p144 = scmp.eq.s32.totalorder %s15, 0
    %p145 = por %p143, %p144
    %p146 = scmp.ne.s32.totalorder %s138, %s140
    %p147 = scmp.eq.s32.totalorder %s20, 1
    %p148 = por %p146, %p147
    %p149 = scmp.ne.s32.totalorder %s140, %s141
    %p150 = scmp.eq.s32.totalorder %s20, 0
    %p151 = por %p149, %p150
    %p152 = scmp.ne.s32.totalorder %s140, %s141
    %p153 = scmp.eq.s32.totalorder %s21, 1
    %p154 = por %p152, %p153
    %p156 = scmp.ne.s32.totalorder %s141, %s155
    %p157 = scmp.eq.s32.totalorder %s21, 0
    %p158 = por %p156, %p157
    %s160 = sadd.s32 %s159, 1
    %p163 = scmp.eq.s32.totalorder %s15, 1
    %p164 = scmp.ne.s32.totalorder %s159, %s161
    %p165 = scmp.eq.s32.totalorder %s15, 0
    %p166 = por %p164, %p165
    %p167 = scmp.ne.s32.totalorder %s159, %s161
    %p168 = scmp.eq.s32.totalorder %s20, 1
    %p169 = por %p167, %p168
    %p170 = scmp.ne.s32.totalorder %s161, %s162
    %p171 = scmp.eq.s32.totalorder %s20, 0
    %p172 = por %p170, %p171
    %p173 = scmp.ne.s32.totalorder %s161, %s162
    %p174 = scmp.eq.s32.totalorder %s21, 1
    %p175 = por %p173, %p174
    %p177 = scmp.ne.s32.totalorder %s162, %s176
    %p178 = scmp.eq.s32.totalorder %s21, 0
    %p179 = por %p177, %p178
    %s181 = sadd.s32 %s180, 1
    %p184 = scmp.eq.s32.totalorder %s15, 1
    %p185 = scmp.ne.s32.totalorder %s180, %s182
    %p186 = scmp.eq.s32.totalorder %s15, 0
    %p187 = por %p185, %p186
    %p188 = scmp.ne.s32.totalorder %s180, %s182
    %p189 = scmp.eq.s32.totalorder %s20, 1
    %p190 = por %p188, %p189
    %p191 = scmp.ne.s32.totalorder %s182, %s183
    %p192 = scmp.eq.s32.totalorder %s20, 0
    %p193 = por %p191, %p192
    %p194 = scmp.ne.s32.totalorder %s182, %s183
    %p195 = scmp.eq.s32.totalorder %s21, 1
    %p196 = por %p194, %p195
    %p198 = scmp.ne.s32.totalorder %s183, %s197
    %p199 = scmp.eq.s32.totalorder %s21, 0
    %p200 = por %p198, %p199
    %s202 = sadd.s32 %s201, 1
    %p205 = scmp.eq.s32.totalorder %s15, 1
    %p206 = scmp.ne.s32.totalorder %s201, %s203
    %p207 = scmp.eq.s32.totalorder %s15, 0
    %p208 = por %p206, %p207
    %p209 = scmp.ne.s32.totalorder %s201, %s203
    %p210 = scmp.eq.s32.totalorder %s20, 1
    %p211 = por %p209, %p210
    %p212 = scmp.ne.s32.totalorder %s203, %s204
    %p213 = scmp.eq.s32.totalorder %s20, 0
    %p214 = por %p212, %p213
    %p215 = scmp.ne.s32.totalorder %s203, %s204
    %p216 = scmp.eq.s32.totalorder %s21, 1
    %p217 = por %p215, %p216
    %p219 = scmp.ne.s32.totalorder %s204, %s218
    %p220 = scmp.eq.s32.totalorder %s21, 0
    %p221 = por %p219, %p220
    %s222 = ssub.s32 %s15, %s22
    %p223 = scmp.eq.s32.totalorder %s222, 0
    %s225 = sadd.s32 %s224, 1
    %s226 = scalar_select %p223, %s224, %s225
    %p229 = pneg %p223
    %p230 = scmp.eq.s32.totalorder %s15, 1
    %p231 = por %p229, %p230
    %p232 = scmp.ne.s32.totalorder %s224, %s227
    %p233 = scmp.eq.s32.totalorder %s15, 0
    %p234 = por %p232, %p233
    %p235 = scmp.ne.s32.totalorder %s224, %s227
    %p236 = scmp.eq.s32.totalorder %s20, 1
    %p237 = por %p235, %p236
    %p238 = scmp.ne.s32.totalorder %s227, %s228
    %p239 = scmp.eq.s32.totalorder %s20, 0
    %p240 = por %p238, %p239
    %p241 = scmp.ne.s32.totalorder %s227, %s228
    %p242 = scmp.eq.s32.totalorder %s21, 1
    %p243 = por %p241, %p242
    %p245 = scmp.ne.s32.totalorder %s228, %s244
    %p246 = scmp.eq.s32.totalorder %s21, 0
    %p247 = por %p245, %p246
    %p248 = scmp.le.s32.totalorder 1, %s15
    %p249 = scmp.lt.s32.totalorder %s15, 3
    %p250 = pnand %p248, %p249
    %p251 = pneg %p250
    // Predicated region
    $region9: #{tpu_custom_call.1} parent=5 // pred_check
      _
    $region10: #{tpu_custom_call.1} parent=5 // pred_check_branch
      %253 = sbr.rel (%p250) target = $region12
    $region11: #{tpu_custom_call.1} parent=5 // pred_region
      %s254 = ssub.s32 %s15, 1
      // Predicated region
      $region13: #{tpu_custom_call.1} parent=11 // pred_check
        %p255 = pneg %p88
      $region14: #{tpu_custom_call.1} parent=11 // pred_check_branch
        %257 = sbr.rel (%p255) target = $region16
      $region15: #{tpu_custom_call.1} parent=11 // pred_region
        _
      $region16: #{tpu_custom_call.1} parent=11 // pred_fallthru
        _
      // Predicated region
      $region17: #{tpu_custom_call.1} parent=11 // pred_check
        %p258 = pneg %p109
      $region18: #{tpu_custom_call.1} parent=11 // pred_check_branch
        %260 = sbr.rel (%p258) target = $region20
      $region19: #{tpu_custom_call.1} parent=11 // pred_region
        _
      $region20: #{tpu_custom_call.1} parent=11 // pred_fallthru
        _
      // Predicated region
      $region21: #{tpu_custom_call.1} parent=11 // pred_check
        %p261 = pneg %p130
      $region22: #{tpu_custom_call.1} parent=11 // pred_check_branch
        %263 = sbr.rel (%p261) target = $region24
      $region23: #{tpu_custom_call.1} parent=11 // pred_region
        _
      $region24: #{tpu_custom_call.1} parent=11 // pred_fallthru
        _
      // Predicated region
      $region25: #{tpu_custom_call.1} parent=11 // pred_check
        %p264 = pneg %p151
      $region26: #{tpu_custom_call.1} parent=11 // pred_check_branch
        %266 = sbr.rel (%p264) target = $region28
      $region27: #{tpu_custom_call.1} parent=11 // pred_region
        _
      $region28: #{tpu_custom_call.1} parent=11 // pred_fallthru
        _
      // Predicated region
      $region29: #{tpu_custom_call.1} parent=11 // pred_check
        %p267 = pneg %p172
      $region30: #{tpu_custom_call.1} parent=11 // pred_check_branch
        %269 = sbr.rel (%p267) target = $region32
      $region31: #{tpu_custom_call.1} parent=11 // pred_region
        _
      $region32: #{tpu_custom_call.1} parent=11 // pred_fallthru
        _
      // Predicated region
      $region33: #{tpu_custom_call.1} parent=11 // pred_check
        %p270 = pneg %p193
      $region34: #{tpu_custom_call.1} parent=11 // pred_check_branch
        %272 = sbr.rel (%p270) target = $region36
      $region35: #{tpu_custom_call.1} parent=11 // pred_region
        _
      $region36: #{tpu_custom_call.1} parent=11 // pred_fallthru
        _
      // Predicated region
      $region37: #{tpu_custom_call.1} parent=11 // pred_check
        %p273 = pneg %p214
      $region38: #{tpu_custom_call.1} parent=11 // pred_check_branch
        %275 = sbr.rel (%p273) target = $region40
      $region39: #{tpu_custom_call.1} parent=11 // pred_region
        _
      $region40: #{tpu_custom_call.1} parent=11 // pred_fallthru
        _
    $region12: #{tpu_custom_call.1} parent=5 // pred_fallthru
      _
    %p276 = scmp.lt.s32.totalorder %s15, 2
    // Predicated region
    $region41: #{tpu_custom_call.1} parent=5 // pred_check
      %p277 = pneg %p276
    $region42: #{tpu_custom_call.1} parent=5 // pred_check_branch
      %279 = sbr.rel (%p277) target = $region44
    $region43: #{tpu_custom_call.1} parent=5 // pred_region
      // Predicated region
      $region45: #{tpu_custom_call.1} parent=43 // pred_check
        %p280 = pneg %p35
      $region46: #{tpu_custom_call.1} parent=43 // pred_check_branch
        %282 = sbr.rel (%p280) target = $region48
      $region47: #{tpu_custom_call.1} parent=43 // pred_region
        %p283 = scmp.lt.s32.totalorder %s15, 1
        %s284 = scalar_select %p283, %s15, 1
        %s285 = smul.addr %s284, 8
        %s286 = scalar_lea.vmem %s0, %s285
      $region48: #{tpu_custom_call.1} parent=43 // pred_fallthru
        _
      // Predicated region
      $region49: #{tpu_custom_call.1} parent=43 // pred_check
        %p287 = pneg %p61
      $region50: #{tpu_custom_call.1} parent=43 // pred_check_branch
        %289 = sbr.rel (%p287) target = $region52
      $region51: #{tpu_custom_call.1} parent=43 // pred_region
        %p290 = scmp.lt.s32.totalorder %s15, 1
        %s291 = scalar_select %p290, %s15, 1
        %s292 = smul.addr %s291, 8
        %s293 = scalar_lea.vmem %s1, %s292
      $region52: #{tpu_custom_call.1} parent=43 // pred_fallthru
        _
    $region44: #{tpu_custom_call.1} parent=5 // pred_fallthru
      _
    %p294 = scmp.le.s32.totalorder 1, %s15
    %p295 = scmp.lt.s32.totalorder %s15, 3
    %p296 = pnand %p294, %p295
    %p297 = pneg %p296
    // Predicated region
    $region53: #{tpu_custom_call.1} parent=5 // pred_check
      _
    $region54: #{tpu_custom_call.1} parent=5 // pred_check_branch
      %299 = sbr.rel (%p296) target = $region56
    $region55: #{tpu_custom_call.1} parent=5 // pred_region
      %s300 = ssub.s32 %s15, 1
      %p301 = scmp.lt.s32.totalorder %s20, 1
      %s302 = scalar_select %p301, %s20, 1
      %s303 = smul.addr %s302, 8
      %s304 = scalar_lea.vmem %s0, %s303
      %p305 = pneg %p41
      %p306 = pneg %p38
      %p307 = scmp.lt.s32.totalorder %s20, 1
      %s308 = scalar_select %p307, %s20, 1
      %s309 = smul.addr %s308, 8
      %s310 = scalar_lea.vmem %s1, %s309
      %p311 = pneg %p67
      %p312 = pneg %p64
      %p313 = pneg %p88
      %p314 = pneg %p85
      %p315 = pneg %p109
      %p316 = pneg %p106
      %p317 = pneg %p130
      %p318 = pneg %p127
      %p319 = pneg %p151
      %p320 = pneg %p148
      %p321 = pneg %p172
      %p322 = pneg %p169
      %p323 = pneg %p193
      %p324 = pneg %p190
      %p325 = pneg %p214
      %p326 = pneg %p211
      %p327 = pneg %p240
      %p328 = pneg %p237
      %p329 = scmp.lt.s32.totalorder %s20, 1
      %s330 = scalar_select %p329, %s20, 1
      %s331 = smul.addr %s330, 8
      %s332 = scalar_lea.vmem %s9, %s331
      %p333 = scmp.lt.s32.totalorder %s20, 1
      %s334 = scalar_select %p333, %s20, 1
      %s335 = smul.addr %s334, 8
      %s336 = scalar_lea.vmem %s0, %s335
      %p337 = scmp.lt.s32.totalorder %s20, 1
      %s338 = scalar_select %p337, %s20, 1
      %s339 = smul.addr %s338, 8
      %s340 = scalar_lea.vmem %s1, %s339
      %p341 = scmp.lt.s32.totalorder %s20, 1
      %s342 = scalar_select %p341, %s20, 1
      %s343 = smul.addr %s342, 8
      %s344 = scalar_lea.vmem %s9, %s343
      %v345 = vld [vmem:[%s336] sm:$0xff]
      %v346 = vld [vmem:[%s2] sm:$0x7]
      %v347 = vld [vmem:[%s340] sm:$0xff]
      %v348 = vld [vmem:[%s3] sm:$0x1]
      %350 = vset.pattern.permute.xlu0 0
      %351 = vperm.xlu0 %350, %v347
      %v352 = vpop.permute.xlu0 %351
      %v355 = vlaneseq
      %v356 = vshrl.u32 %v355, 7
      %v357 = vsub.s32 0, %v356
      %v358 = vrot.slane %v348, %v357
      %v360 = vmul.f32 %v352, %v358
      %vm361 = vcmask 23552
      %v363 = vsel %vm361, %v345, 0
      %vm365 = vcmask 1042432
      %v367 = vsel %vm365, %v346, 0
      %369 = vmatprep.subr.mxu0 0.0
      %370 = vmatpush1.msra.mxu0 %v367
      %371 = vmatprep.subr.mxu0 0.0
      %372 = vmatpush1.msra.mxu0 0.0
      %373 = vmatprep.subr.mxu0 0.0
      %374 = vmatpush1.msra.mxu0 0.0
      %375 = vmatprep.subr.mxu0 0.0
      %376 = vmatpush1.msra.mxu0 0.0
      %377 = vmatprep.subr.mxu0 0.0
      %378 = vmatpush1.msra.mxu0 0.0
      %379 = vmatprep.subr.mxu0 0.0
      %380 = vmatpush1.msra.mxu0 0.0
      %381 = vmatprep.subr.mxu0 0.0
      %382 = vmatpush1.msra.mxu0 0.0
      %383 = vmatprep.subr.mxu0 0.0
      %384 = vmatpush1.msra.mxu0 0.0
      %385 = vmatprep.subr.mxu0 0.0
      %386 = vmatpush1.msra.mxu0 0.0
      %387 = vmatprep.subr.mxu0 0.0
      %388 = vmatpush1.msra.mxu0 0.0
      %389 = vmatprep.subr.mxu0 0.0
      %390 = vmatpush1.msra.mxu0 0.0
      %391 = vmatprep.subr.mxu0 0.0
      %392 = vmatpush1.msra.mxu0 0.0
      %393 = vmatprep.subr.mxu0 0.0
      %394 = vmatpush1.msra.mxu0 0.0
      %395 = vmatprep.subr.mxu0 0.0
      %396 = vmatpush1.msra.mxu0 0.0
      %397 = vmatprep.subr.mxu0 0.0
      %398 = vmatpush1.msra.mxu0 0.0
      %399 = vmatprep.subr.mxu0 0.0
      %400 = vmatpush1.msra.mxu0 0.0
      %401 = vmatprep.subr.mxu0 0.0
      %402 = vmatpush1.msra.mxu0 0.0
      %403 = vmatprep.subr.mxu0 0.0
      %404 = vmatpush1.msra.mxu0 0.0
      %405 = vmatprep.subr.mxu0 0.0
      %406 = vmatpush1.msra.mxu0 0.0
      %407 = vmatprep.subr.mxu0 0.0
      %408 = vmatpush1.msra.mxu0 0.0
      %409 = vmatprep.subr.mxu0 0.0
      %410 = vmatpush1.msra.mxu0 0.0
      %411 = vmatprep.subr.mxu0 0.0
      %412 = vmatpush1.msra.mxu0 0.0
      %413 = vmatprep.subr.mxu0 0.0
      %414 = vmatpush1.msra.mxu0 0.0
      %415 = vmatprep.subr.mxu0 0.0
      %416 = vmatpush1.msra.mxu0 0.0
      %417 = vmatprep.subr.mxu0 0.0
      %418 = vmatpush1.msra.mxu0 0.0
      %419 = vmatprep.subr.mxu0 0.0
      %420 = vmatpush1.msra.mxu0 0.0
      %421 = vmatprep.subr.mxu0 0.0
      %422 = vmatpush1.msra.mxu0 0.0
      %423 = vmatprep.subr.mxu0 0.0
      %424 = vmatpush1.msra.mxu0 0.0
      %425 = vmatprep.subr.mxu0 0.0
      %426 = vmatpush1.msra.mxu0 0.0
      %427 = vmatprep.subr.mxu0 0.0
      %428 = vmatpush1.msra.mxu0 0.0
      %429 = vmatprep.subr.mxu0 0.0
      %430 = vmatpush1.msra.mxu0 0.0
      %431 = vmatprep.subr.mxu0 0.0
      %432 = vmatpush1.msra.mxu0 0.0
      %433 = vmatprep.mubr.f32.mxu0 0.0
      %434 = vmatmul.mubr.f32.gmra.mrb[0].mxu0 %v363
      %v435 = vpop.f32.mrb[0].mxu0
      %v436 = vadd.f32 %v360, %v435
      %v437 = vpop.f32.mrb[0].mxu0
      %438 = vdwg.mxu0
      %v439 = vld [vmem:[%s4] sm:$0x1]
      %v441 = vlaneseq
      %v442 = vshrl.u32 %v441, 7
      %v443 = vsub.s32 0, %v442
      %v444 = vrot.slane %v439, %v443
      %v446 = vadd.f32 %v436, %v444
      %v447 = vmax.f32 %v446, 0.0
      %v448 = vld [vmem:[%s5] sm:$0xff]
      %v449 = vld [vmem:[%s5 + $0x8] sm:$0xff]
      %v450 = vld [vmem:[%s5 + $0x10] sm:$0xff]
      %v451 = vld [vmem:[%s5 + $0x18] sm:$0xff]
      %v452 = vld [vmem:[%s6] sm:$0x1]
      %v454 = vlaneseq
      %v455 = vshrl.u32 %v454, 7
      %v456 = vsub.s32 0, %v455
      %v457 = vrot.slane %v452, %v456
      %vm459 = vcmask 261120
      %v461 = vsel %vm459, %v447, 0
      %463 = vmatprep.subr.mxu0 0.0
      %464 = vmatpush1.msra.mxu0 %v448
      %465 = vmatprep.subr.mxu0 0.0
      %466 = vmatpush1.msra.mxu0 %v449
      %467 = vmatprep.subr.mxu0 0.0
      %468 = vmatpush1.msra.mxu0 %v450
      %469 = vmatprep.subr.mxu0 0.0
      %470 = vmatpush1.msra.mxu0 %v451
      %471 = vmatprep.subr.mxu0 0.0
      %472 = vmatpush1.msra.mxu0 0.0
      %473 = vmatprep.subr.mxu0 0.0
      %474 = vmatpush1.msra.mxu0 0.0
      %475 = vmatprep.subr.mxu0 0.0
      %476 = vmatpush1.msra.mxu0 0.0
      %477 = vmatprep.subr.mxu0 0.0
      %478 = vmatpush1.msra.mxu0 0.0
      %479 = vmatprep.subr.mxu0 0.0
      %480 = vmatpush1.msra.mxu0 0.0
      %481 = vmatprep.subr.mxu0 0.0
      %482 = vmatpush1.msra.mxu0 0.0
      %483 = vmatprep.subr.mxu0 0.0
      %484 = vmatpush1.msra.mxu0 0.0
      %485 = vmatprep.subr.mxu0 0.0
      %486 = vmatpush1.msra.mxu0 0.0
      %487 = vmatprep.subr.mxu0 0.0
      %488 = vmatpush1.msra.mxu0 0.0
      %489 = vmatprep.subr.mxu0 0.0
      %490 = vmatpush1.msra.mxu0 0.0
      %491 = vmatprep.subr.mxu0 0.0
      %492 = vmatpush1.msra.mxu0 0.0
      %493 = vmatprep.subr.mxu0 0.0
      %494 = vmatpush1.msra.mxu0 0.0
      %495 = vmatprep.subr.mxu0 0.0
      %496 = vmatpush1.msra.mxu0 0.0
      %497 = vmatprep.subr.mxu0 0.0
      %498 = vmatpush1.msra.mxu0 0.0
      %499 = vmatprep.subr.mxu0 0.0
      %500 = vmatpush1.msra.mxu0 0.0
      %501 = vmatprep.subr.mxu0 0.0
      %502 = vmatpush1.msra.mxu0 0.0
      %503 = vmatprep.subr.mxu0 0.0
      %504 = vmatpush1.msra.mxu0 0.0
      %505 = vmatprep.subr.mxu0 0.0
      %506 = vmatpush1.msra.mxu0 0.0
      %507 = vmatprep.subr.mxu0 0.0
      %508 = vmatpush1.msra.mxu0 0.0
      %509 = vmatprep.subr.mxu0 0.0
      %510 = vmatpush1.msra.mxu0 0.0
      %511 = vmatprep.subr.mxu0 0.0
      %512 = vmatpush1.msra.mxu0 0.0
      %513 = vmatprep.subr.mxu0 0.0
      %514 = vmatpush1.msra.mxu0 0.0
      %515 = vmatprep.subr.mxu0 0.0
      %516 = vmatpush1.msra.mxu0 0.0
      %517 = vmatprep.subr.mxu0 0.0
      %518 = vmatpush1.msra.mxu0 0.0
      %519 = vmatprep.subr.mxu0 0.0
      %520 = vmatpush1.msra.mxu0 0.0
      %521 = vmatprep.subr.mxu0 0.0
      %522 = vmatpush1.msra.mxu0 0.0
      %523 = vmatprep.subr.mxu0 0.0
      %524 = vmatpush1.msra.mxu0 0.0
      %525 = vmatprep.subr.mxu0 0.0
      %526 = vmatpush1.msra.mxu0 0.0
      %527 = vmatprep.mubr.f32.mxu0 0.0
      %528 = vmatmul.mubr.f32.gmra.mrb[0].mxu0 %v461
      %v529 = vpop.f32.mrb[0].mxu0
      %v530 = vadd.f32 %v457, %v529
      %v531 = vpop.f32.mrb[0].mxu0
      %532 = vdwg.mxu0
      %v533 = vmax.f32 %v530, 0.0
      %v534 = vld [vmem:[%s7] sm:$0xff]
      %v535 = vld [vmem:[%s7 + $0x8] sm:$0xff]
      %v536 = vld [vmem:[%s7 + $0x10] sm:$0xff]
      %v537 = vld [vmem:[%s7 + $0x18] sm:$0xff]
      %v538 = vld [vmem:[%s8] sm:$0x1]
      %v540 = vlaneseq
      %v541 = vshrl.u32 %v540, 7
      %v542 = vsub.s32 0, %v541
      %v543 = vrot.slane %v538, %v542
      %v546 = vsel %vm459, %v533, 0
      %548 = vmatprep.subr.mxu0 0.0
      %549 = vmatpush1.msra.mxu0 %v534
      %550 = vmatprep.subr.mxu0 0.0
      %551 = vmatpush1.msra.mxu0 %v535
      %552 = vmatprep.subr.mxu0 0.0
      %553 = vmatpush1.msra.mxu0 %v536
      %554 = vmatprep.subr.mxu0 0.0
      %555 = vmatpush1.msra.mxu0 %v537
      %556 = vmatprep.subr.mxu0 0.0
      %557 = vmatpush1.msra.mxu0 0.0
      %558 = vmatprep.subr.mxu0 0.0
      %559 = vmatpush1.msra.mxu0 0.0
      %560 = vmatprep.subr.mxu0 0.0
      %561 = vmatpush1.msra.mxu0 0.0
      %562 = vmatprep.subr.mxu0 0.0
      %563 = vmatpush1.msra.mxu0 0.0
      %564 = vmatprep.subr.mxu0 0.0
      %565 = vmatpush1.msra.mxu0 0.0
      %566 = vmatprep.subr.mxu0 0.0
      %567 = vmatpush1.msra.mxu0 0.0
      %568 = vmatprep.subr.mxu0 0.0
      %569 = vmatpush1.msra.mxu0 0.0
      %570 = vmatprep.subr.mxu0 0.0
      %571 = vmatpush1.msra.mxu0 0.0
      %572 = vmatprep.subr.mxu0 0.0
      %573 = vmatpush1.msra.mxu0 0.0
      %574 = vmatprep.subr.mxu0 0.0
      %575 = vmatpush1.msra.mxu0 0.0
      %576 = vmatprep.subr.mxu0 0.0
      %577 = vmatpush1.msra.mxu0 0.0
      %578 = vmatprep.subr.mxu0 0.0
      %579 = vmatpush1.msra.mxu0 0.0
      %580 = vmatprep.subr.mxu0 0.0
      %581 = vmatpush1.msra.mxu0 0.0
      %582 = vmatprep.subr.mxu0 0.0
      %583 = vmatpush1.msra.mxu0 0.0
      %584 = vmatprep.subr.mxu0 0.0
      %585 = vmatpush1.msra.mxu0 0.0
      %586 = vmatprep.subr.mxu0 0.0
      %587 = vmatpush1.msra.mxu0 0.0
      %588 = vmatprep.subr.mxu0 0.0
      %589 = vmatpush1.msra.mxu0 0.0
      %590 = vmatprep.subr.mxu0 0.0
      %591 = vmatpush1.msra.mxu0 0.0
      %592 = vmatprep.subr.mxu0 0.0
      %593 = vmatpush1.msra.mxu0 0.0
      %594 = vmatprep.subr.mxu0 0.0
      %595 = vmatpush1.msra.mxu0 0.0
      %596 = vmatprep.subr.mxu0 0.0
      %597 = vmatpush1.msra.mxu0 0.0
      %598 = vmatprep.subr.mxu0 0.0
      %599 = vmatpush1.msra.mxu0 0.0
      %600 = vmatprep.subr.mxu0 0.0
      %601 = vmatpush1.msra.mxu0 0.0
      %602 = vmatprep.subr.mxu0 0.0
      %603 = vmatpush1.msra.mxu0 0.0
      %604 = vmatprep.subr.mxu0 0.0
      %605 = vmatpush1.msra.mxu0 0.0
      %606 = vmatprep.subr.mxu0 0.0
      %607 = vmatpush1.msra.mxu0 0.0
      %608 = vmatprep.subr.mxu0 0.0
      %609 = vmatpush1.msra.mxu0 0.0
      %610 = vmatprep.subr.mxu0 0.0
      %611 = vmatpush1.msra.mxu0 0.0
      %612 = vmatprep.mubr.f32.mxu0 0.0
      %613 = vmatmul.mubr.f32.gmra.mrb[0].mxu0 %v546
      %v614 = vpop.f32.mrb[0].mxu0
      %v615 = vadd.f32 %v543, %v614
      %v616 = vpop.f32.mrb[0].mxu0
      %617 = vdwg.mxu0
      %618 = vst.msk [vmem:[%s344] sm:$0xff] %vm361, %v615
      %p619 = scmp.lt.s32.totalorder %s20, 1
      %s620 = scalar_select %p619, %s20, 1
      %s621 = smul.addr %s620, 8
      %s622 = scalar_lea.vmem %s9, %s621
      // Predicated region
      $region57: #{tpu_custom_call.1} parent=55 // pred_check
        %p623 = pneg %p237
      $region58: #{tpu_custom_call.1} parent=55 // pred_check_branch
        %625 = sbr.rel (%p623) target = $region60
      $region59: #{tpu_custom_call.1} parent=55 // pred_region
        _
      $region60: #{tpu_custom_call.1} parent=55 // pred_fallthru
        _
    $region56: #{tpu_custom_call.1} parent=5 // pred_fallthru
      _
    %p626 = scmp.le.s32.totalorder 2, %s15
    // Predicated region
    $region61: #{tpu_custom_call.1} parent=5 // pred_check
      %p627 = pneg %p626
    $region62: #{tpu_custom_call.1} parent=5 // pred_check_branch
      %629 = sbr.rel (%p627) target = $region64
    $region63: #{tpu_custom_call.1} parent=5 // pred_region
      %s630 = ssub.s32 %s15, 2
      // Predicated region
      $region65: #{tpu_custom_call.1} parent=63 // pred_check
        %p631 = pneg %p243
      $region66: #{tpu_custom_call.1} parent=63 // pred_check_branch
        %633 = sbr.rel (%p631) target = $region68
      $region67: #{tpu_custom_call.1} parent=63 // pred_region
        %p634 = scmp.lt.s32.totalorder %s21, 1
        %s635 = scalar_select %p634, %s21, 1
        %s636 = smul.addr %s635, 8
        %s637 = scalar_lea.vmem %s9, %s636
      $region68: #{tpu_custom_call.1} parent=63 // pred_fallthru
        _
    $region64: #{tpu_custom_call.1} parent=5 // pred_fallthru
      _
  $region6: #{tpu_custom_call.1} parent=0 // loop_footer
    %s19 = sadd.s32 1, %s15
  $region7: #{tpu_custom_call.1} parent=0 // loop_footer_branch
    %14 = sbr.rel target = $region3
  $region8: #{tpu_custom_call.1} parent=0 // loop_exit
    _

</llo_original>
